<compile_context>
chip_gen: v7x
topology: tpu7x:2x2x1
jax: 0.10.0
libtpu: 0.0.40
codegen_flags: <defaults>
</compile_context>

<pallas_src>
import jax
import jax.numpy as jnp
from jax.experimental import pallas as pl
from jax.experimental.pallas import tpu as pltpu

# ----------------------------------------------------------------------------
# Model configuration (deterministic small shapes, consistent with the module)
# ----------------------------------------------------------------------------
TABLES = [("feature_0", 50, 16), ("feature_1", 40, 8)]          # (name, num_emb, dim)
WEIGHTED_TABLES = [("weighted_feature_0", 30, 8)]
NUM_FLOAT_FEATURES = 16     # self.in_features
DENSE_OUT = 8               # self.out_features
OVER_OUT = 12               # over Linear out_features
BATCH = 2
BAG_LEN = 5                 # fixed bag length per feature
B_PAD = 8                   # native sublane tile
OUT_LANES = 128             # lane-dense output slab

TOWER0_DIM = sum(d for _, _, d in TABLES)            # 24
WTOWER0_DIM = sum(d for _, _, d in WEIGHTED_TABLES)  # 8
OVER_IN = DENSE_OUT + TOWER0_DIM + WTOWER0_DIM       # 40

N_EMB_TOTAL = sum(n for _, n, _ in TABLES + WEIGHTED_TABLES)   # 120 packed table rows
EMB_OFF_1 = TABLES[0][1]                                       # 50
EMB_OFF_W = TABLES[0][1] + TABLES[1][1]                        # 90
COEF_ROWS = NUM_FLOAT_FEATURES + N_EMB_TOTAL + 1               # 137  (A | B | c)


# ----------------------------------------------------------------------------
# One-time parameter packing / algebraic folding (host side, runs once at init)
# ----------------------------------------------------------------------------
def pack_params(params):
    f32 = jnp.float32
    n0, d0 = TABLES[0][1], TABLES[0][2]
    n1, d1 = TABLES[1][1], TABLES[1][2]
    nw, dw = WEIGHTED_TABLES[0][1], WEIGHTED_TABLES[0][2]
    n_cols = d0 + d1 + dw                                      # 32

    # Block-diagonal packed embedding tables: concat(p0, p1, pw) == PM @ t_packed
    t_packed = jnp.zeros((N_EMB_TOTAL, n_cols), f32)
    t_packed = t_packed.at[0:n0, 0:d0].set(params["emb"]["feature_0"])
    t_packed = t_packed.at[n0:n0 + n1, d0:d0 + d1].set(params["emb"]["feature_1"])
    t_packed = t_packed.at[n0 + n1:, d0 + d1:].set(params["emb"]["weighted_feature_0"])

    # Block-diagonal packed tower-interaction Linears.
    wti, bti = params["tower0_interaction"]    # [24,24],[24]
    wwi, bwi = params["wtower0_interaction"]   # [8,8],[8]
    w_tb = jnp.zeros((n_cols, n_cols), f32)
    w_tb = w_tb.at[0:TOWER0_DIM, 0:TOWER0_DIM].set(wti)
    w_tb = w_tb.at[TOWER0_DIM:, TOWER0_DIM:].set(wwi)
    b_t = jnp.concatenate([bti, bwi])          # [32]

    wd, bd = params["dense"]                   # [16,8],[8]
    wo, bo = params["over"]                    # [40,12],[12]

    # Fold the final mean over the over-Linear outputs into the weights.
    wom = jnp.mean(wo, axis=1, keepdims=True)  # [40,1]
    bom = jnp.mean(bo)                         # scalar
    wom_d = wom[0:DENSE_OUT]                   # [8,1]   (dense_r part)
    wom_t = wom[DENSE_OUT:]                    # [32,1]  (tower outputs part)

    # Full affine fold:  logit = x @ A + PM @ B + c
    a_vec = wd @ wom_d                                     # [16,1]
    b_vec = t_packed @ (w_tb @ wom_t)                      # [120,1]
    c_val = bd @ wom_d + b_t @ wom_t + bom                 # [1]

    coef_col = jnp.concatenate([a_vec, b_vec, c_val.reshape(1, 1)], axis=0)  # [137,1]
    # Replicate across 128 lanes so the in-kernel dots directly emit a lane-dense slab.
    return jnp.tile(coef_col, (1, OUT_LANES)).astype(f32)  # [137,128]


# ----------------------------------------------------------------------------
# Fused Pallas kernel: 15 compares + 2 MXU dots + sigmoid; everything in VMEM.
# ----------------------------------------------------------------------------
def _fused_forward_kernel(x_ref, ids_ref, wts_ref, coef_ref, o_ref):
    f32 = jnp.float32

    # Static views into the single coefficient slab.
    a_rep = coef_ref[0:NUM_FLOAT_FEATURES, :]                                   # [16,128]
    b_rep = coef_ref[NUM_FLOAT_FEATURES:NUM_FLOAT_FEATURES + N_EMB_TOTAL, :]    # [120,128]
    c_rep = coef_ref[NUM_FLOAT_FEATURES + N_EMB_TOTAL:COEF_ROWS, :]             # [1,128]

    ids = ids_ref[...]   # [B_PAD, 3*L] int32, per-feature row offsets already added
    wts = wts_ref[...]   # [B_PAD, L]   f32 per-sample weights (weighted bag)

    # Block-structured pooling matrix over the packed tables, built in-register.
    col = jax.lax.broadcasted_iota(jnp.int32, (B_PAD, N_EMB_TOTAL), 1)
    pm = jnp.zeros((B_PAD, N_EMB_TOTAL), f32)
    for l in range(2 * BAG_LEN):                 # unweighted sum pooling (features 0,1)
        pm = pm + (col == ids[:, l:l + 1]).astype(f32)
    for l in range(BAG_LEN):                     # weighted sum pooling (weighted_feature_0)
        j = 2 * BAG_LEN + l
        pm = pm + jnp.where(col == ids[:, j:j + 1], wts[:, l:l + 1], 0.0)

    # logit = x @ A + PM @ B + c   (coefficients replicated across lanes -> lane-dense)
    logit = (jnp.dot(x_ref[...], a_rep, preferred_element_type=f32)
             + jnp.dot(pm, b_rep, preferred_element_type=f32)
             + c_rep)                                            # [B_PAD, 128]
    o_ref[...] = jax.nn.sigmoid(logit).astype(o_ref.dtype)


@jax.jit
def fused_forward(coef, float_features, idlist_ids, idscore_ids, idscore_weights):
    """Runs the whole TestTowerCollectionModel eval forward in one pallas_call."""
    b = float_features.shape[0]

    # Minimal per-call input packing (fuses into a couple of tiny XLA ops).
    xf = jnp.pad(float_features.astype(jnp.float32), ((0, B_PAD - b), (0, 0)))
    ids = jnp.concatenate(
        [idlist_ids[0],
         idlist_ids[1] + EMB_OFF_1,
         idscore_ids[0] + EMB_OFF_W], axis=1).astype(jnp.int32)          # [b, 15]
    ids = jnp.pad(ids, ((0, B_PAD - b), (0, 0)))
    wts = jnp.pad(idscore_weights[0].astype(jnp.float32), ((0, B_PAD - b), (0, 0)))

    out = pl.pallas_call(
        _fused_forward_kernel,
        out_shape=jax.ShapeDtypeStruct((B_PAD, OUT_LANES), jnp.float32),
        in_specs=[pl.BlockSpec(memory_space=pltpu.MemorySpace.VMEM)] * 4,
        out_specs=pl.BlockSpec(memory_space=pltpu.MemorySpace.VMEM),
    )(xf, ids, wts, coef)

    return out[:b, 0]


# ----------------------------------------------------------------------------
# Parameter init (matches PyTorch nn.Linear init ranges; tables ~ N(0, 1))
# ----------------------------------------------------------------------------
def init_linear(key, din, dout):
    kw, kb = jax.random.split(key)
    bound = 1.0 / jnp.sqrt(jnp.asarray(din, jnp.float32))
    w = jax.random.uniform(kw, (din, dout), jnp.float32, -bound, bound)
    b = jax.random.uniform(kb, (dout,), jnp.float32, -bound, bound)
    return w, b


def init_params(key):
    params = {"emb": {}}
    keys = jax.random.split(key, 8)
    for i, (name, n_emb, dim) in enumerate(TABLES + WEIGHTED_TABLES):
        params["emb"][name] = jax.random.normal(keys[i], (n_emb, dim), jnp.float32)
    params["dense"] = init_linear(keys[3], NUM_FLOAT_FEATURES, DENSE_OUT)
    params["tower0_interaction"] = init_linear(keys[4], TOWER0_DIM, TOWER0_DIM)
    params["wtower0_interaction"] = init_linear(keys[5], WTOWER0_DIM, WTOWER0_DIM)
    params["over"] = init_linear(keys[6], OVER_IN, OVER_OUT)
    return params


# ----------------------------------------------------------------------------
# Pure-JAX unfused reference (checks the folded kernel's numerics / semantics)
# ----------------------------------------------------------------------------
def reference_forward(params, float_features, idlist_ids, idscore_ids, idscore_weights):
    dense_r = float_features @ params["dense"][0] + params["dense"][1]

    def pool(ids, wts, table):
        onehot = jax.nn.one_hot(ids, table.shape[0], dtype=jnp.float32)  # [B, L, N]
        return jnp.einsum("bln,bl->bn", onehot, wts) @ table

    p0 = pool(idlist_ids[0], jnp.ones(idlist_ids[0].shape, jnp.float32),
              params["emb"]["feature_0"])
    p1 = pool(idlist_ids[1], jnp.ones(idlist_ids[1].shape, jnp.float32),
              params["emb"]["feature_1"])
    t0_out = (jnp.concatenate([p0, p1], axis=1) @ params["tower0_interaction"][0]
              + params["tower0_interaction"][1])

    pw = pool(idscore_ids[0], idscore_weights[0], params["emb"]["weighted_feature_0"])
    wt_out = pw @ params["wtower0_interaction"][0] + params["wtower0_interaction"][1]

    over_in = jnp.concatenate([dense_r, t0_out, wt_out], axis=1)
    over_r = over_in @ params["over"][0] + params["over"][1]
    return jax.nn.sigmoid(jnp.mean(over_r, axis=1))


if __name__ == "__main__":
    key = jax.random.PRNGKey(0)
    kp, kx, ki0, ki1, kw0, kws = jax.random.split(key, 6)

    params = init_params(kp)
    coef = jax.block_until_ready(pack_params(params))   # one-time fold/pack at init

    float_features = jax.random.normal(kx, (BATCH, NUM_FLOAT_FEATURES), jnp.float32)
    idlist_ids = [
        jax.random.randint(ki0, (BATCH, BAG_LEN), 0, TABLES[0][1], jnp.int32),
        jax.random.randint(ki1, (BATCH, BAG_LEN), 0, TABLES[1][1], jnp.int32),
    ]
    idscore_ids = [
        jax.random.randint(kw0, (BATCH, BAG_LEN), 0, WEIGHTED_TABLES[0][1], jnp.int32),
    ]
    idscore_weights = [
        jax.random.uniform(kws, (BATCH, BAG_LEN), jnp.float32, 0.0, 1.0),
    ]

    pred = fused_forward(coef, float_features, idlist_ids, idscore_ids, idscore_weights)
    pred = jax.block_until_ready(pred)

    ref = reference_forward(params, float_features, idlist_ids, idscore_ids, idscore_weights)

    assert pred.shape == (BATCH,)
    assert bool(jnp.all(jnp.isfinite(pred)))
    assert bool(jnp.all((pred >= 0) & (pred <= 1)))
    # Tolerance slightly looser than before: the init-time affine fold reorders f32
    # accumulations relative to the unfused reference.
    assert bool(jnp.allclose(pred, ref, rtol=1e-3, atol=1e-4)), (pred, ref)
    print("KERNEL_OK")
</pallas_src>

<mosaic_0001>
module attributes {stable_mosaic.version = 11 : i64} {
  func.func @_fused_forward_kernel(%arg0: memref<8x16xf32, #tpu.memory_space<vmem>>, %arg1: memref<8x15xi32, #tpu.memory_space<vmem>>, %arg2: memref<8x5xf32, #tpu.memory_space<vmem>>, %arg3: memref<137x128xf32, #tpu.memory_space<vmem>>, %arg4: memref<8x128xf32, #tpu.memory_space<vmem>>) attributes {dimension_semantics = [], scalar_prefetch = 0 : i64, scratch_operands = 0 : i64, tpu.core_type = #tpu.core_type<tc>} {
    %c0 = arith.constant 0 : index
    %c0_0 = arith.constant 0 : index
    %0 = vector.load %arg3[%c0, %c0_0] : memref<137x128xf32, #tpu.memory_space<vmem>>, vector<16x128xf32>
    %c16 = arith.constant 16 : index
    %c0_1 = arith.constant 0 : index
    %1 = vector.load %arg3[%c16, %c0_1] : memref<137x128xf32, #tpu.memory_space<vmem>>, vector<120x128xf32>
    %c136 = arith.constant 136 : index
    %c0_2 = arith.constant 0 : index
    %2 = vector.load %arg3[%c136, %c0_2] : memref<137x128xf32, #tpu.memory_space<vmem>>, vector<1x128xf32>
    %c0_3 = arith.constant 0 : index
    %c0_4 = arith.constant 0 : index
    %3 = vector.load %arg1[%c0_3, %c0_4] : memref<8x15xi32, #tpu.memory_space<vmem>>, vector<8x15xi32>
    %c0_5 = arith.constant 0 : index
    %c0_6 = arith.constant 0 : index
    %4 = vector.load %arg2[%c0_5, %c0_6] : memref<8x5xf32, #tpu.memory_space<vmem>>, vector<8x5xf32>
    %5 = tpu.iota {dimensions = array<i32: 1>} : vector<8x120xi32>
    %cst = arith.constant 0.000000e+00 : f32
    %6 = vector.broadcast %cst : f32 to vector<8x120xf32>
    %7 = vector.extract_strided_slice %3 {offsets = [0, 0], sizes = [8, 1], strides = [1, 1]} : vector<8x15xi32> to vector<8x1xi32>
    %8 = vector.broadcast %7 : vector<8x1xi32> to vector<8x120xi32>
    %9 = arith.cmpi eq, %5, %8 : vector<8x120xi32>
    %10 = arith.extui %9 : vector<8x120xi1> to vector<8x120xi32>
    %11 = arith.sitofp %10 : vector<8x120xi32> to vector<8x120xf32>
    %12 = arith.addf %6, %11 : vector<8x120xf32>
    %13 = vector.extract_strided_slice %3 {offsets = [0, 1], sizes = [8, 1], strides = [1, 1]} : vector<8x15xi32> to vector<8x1xi32>
    %14 = vector.broadcast %13 : vector<8x1xi32> to vector<8x120xi32>
    %15 = arith.cmpi eq, %5, %14 : vector<8x120xi32>
    %16 = arith.extui %15 : vector<8x120xi1> to vector<8x120xi32>
    %17 = arith.sitofp %16 : vector<8x120xi32> to vector<8x120xf32>
    %18 = arith.addf %12, %17 : vector<8x120xf32>
    %19 = vector.extract_strided_slice %3 {offsets = [0, 2], sizes = [8, 1], strides = [1, 1]} : vector<8x15xi32> to vector<8x1xi32>
    %20 = vector.broadcast %19 : vector<8x1xi32> to vector<8x120xi32>
    %21 = arith.cmpi eq, %5, %20 : vector<8x120xi32>
    %22 = arith.extui %21 : vector<8x120xi1> to vector<8x120xi32>
    %23 = arith.sitofp %22 : vector<8x120xi32> to vector<8x120xf32>
    %24 = arith.addf %18, %23 : vector<8x120xf32>
    %25 = vector.extract_strided_slice %3 {offsets = [0, 3], sizes = [8, 1], strides = [1, 1]} : vector<8x15xi32> to vector<8x1xi32>
    %26 = vector.broadcast %25 : vector<8x1xi32> to vector<8x120xi32>
    %27 = arith.cmpi eq, %5, %26 : vector<8x120xi32>
    %28 = arith.extui %27 : vector<8x120xi1> to vector<8x120xi32>
    %29 = arith.sitofp %28 : vector<8x120xi32> to vector<8x120xf32>
    %30 = arith.addf %24, %29 : vector<8x120xf32>
    %31 = vector.extract_strided_slice %3 {offsets = [0, 4], sizes = [8, 1], strides = [1, 1]} : vector<8x15xi32> to vector<8x1xi32>
    %32 = vector.broadcast %31 : vector<8x1xi32> to vector<8x120xi32>
    %33 = arith.cmpi eq, %5, %32 : vector<8x120xi32>
    %34 = arith.extui %33 : vector<8x120xi1> to vector<8x120xi32>
    %35 = arith.sitofp %34 : vector<8x120xi32> to vector<8x120xf32>
    %36 = arith.addf %30, %35 : vector<8x120xf32>
    %37 = vector.extract_strided_slice %3 {offsets = [0, 5], sizes = [8, 1], strides = [1, 1]} : vector<8x15xi32> to vector<8x1xi32>
    %38 = vector.broadcast %37 : vector<8x1xi32> to vector<8x120xi32>
    %39 = arith.cmpi eq, %5, %38 : vector<8x120xi32>
    %40 = arith.extui %39 : vector<8x120xi1> to vector<8x120xi32>
    %41 = arith.sitofp %40 : vector<8x120xi32> to vector<8x120xf32>
    %42 = arith.addf %36, %41 : vector<8x120xf32>
    %43 = vector.extract_strided_slice %3 {offsets = [0, 6], sizes = [8, 1], strides = [1, 1]} : vector<8x15xi32> to vector<8x1xi32>
    %44 = vector.broadcast %43 : vector<8x1xi32> to vector<8x120xi32>
    %45 = arith.cmpi eq, %5, %44 : vector<8x120xi32>
    %46 = arith.extui %45 : vector<8x120xi1> to vector<8x120xi32>
    %47 = arith.sitofp %46 : vector<8x120xi32> to vector<8x120xf32>
    %48 = arith.addf %42, %47 : vector<8x120xf32>
    %49 = vector.extract_strided_slice %3 {offsets = [0, 7], sizes = [8, 1], strides = [1, 1]} : vector<8x15xi32> to vector<8x1xi32>
    %50 = vector.broadcast %49 : vector<8x1xi32> to vector<8x120xi32>
    %51 = arith.cmpi eq, %5, %50 : vector<8x120xi32>
    %52 = arith.extui %51 : vector<8x120xi1> to vector<8x120xi32>
    %53 = arith.sitofp %52 : vector<8x120xi32> to vector<8x120xf32>
    %54 = arith.addf %48, %53 : vector<8x120xf32>
    %55 = vector.extract_strided_slice %3 {offsets = [0, 8], sizes = [8, 1], strides = [1, 1]} : vector<8x15xi32> to vector<8x1xi32>
    %56 = vector.broadcast %55 : vector<8x1xi32> to vector<8x120xi32>
    %57 = arith.cmpi eq, %5, %56 : vector<8x120xi32>
    %58 = arith.extui %57 : vector<8x120xi1> to vector<8x120xi32>
    %59 = arith.sitofp %58 : vector<8x120xi32> to vector<8x120xf32>
    %60 = arith.addf %54, %59 : vector<8x120xf32>
    %61 = vector.extract_strided_slice %3 {offsets = [0, 9], sizes = [8, 1], strides = [1, 1]} : vector<8x15xi32> to vector<8x1xi32>
    %62 = vector.broadcast %61 : vector<8x1xi32> to vector<8x120xi32>
    %63 = arith.cmpi eq, %5, %62 : vector<8x120xi32>
    %64 = arith.extui %63 : vector<8x120xi1> to vector<8x120xi32>
    %65 = arith.sitofp %64 : vector<8x120xi32> to vector<8x120xf32>
    %66 = arith.addf %60, %65 : vector<8x120xf32>
    %67 = vector.extract_strided_slice %3 {offsets = [0, 10], sizes = [8, 1], strides = [1, 1]} : vector<8x15xi32> to vector<8x1xi32>
    %68 = vector.broadcast %67 : vector<8x1xi32> to vector<8x120xi32>
    %69 = arith.cmpi eq, %5, %68 : vector<8x120xi32>
    %70 = vector.extract_strided_slice %4 {offsets = [0, 0], sizes = [8, 1], strides = [1, 1]} : vector<8x5xf32> to vector<8x1xf32>
    %cst_7 = arith.constant 0.000000e+00 : f32
    %71 = vector.shape_cast %70 : vector<8x1xf32> to vector<8x1xf32>
    %72 = vector.broadcast %71 : vector<8x1xf32> to vector<8x120xf32>
    %73 = vector.broadcast %cst_7 : f32 to vector<8x120xf32>
    %74 = arith.select %69, %72, %73 : vector<8x120xi1>, vector<8x120xf32>
    %75 = arith.addf %66, %74 : vector<8x120xf32>
    %76 = vector.extract_strided_slice %3 {offsets = [0, 11], sizes = [8, 1], strides = [1, 1]} : vector<8x15xi32> to vector<8x1xi32>
    %77 = vector.broadcast %76 : vector<8x1xi32> to vector<8x120xi32>
    %78 = arith.cmpi eq, %5, %77 : vector<8x120xi32>
    %79 = vector.extract_strided_slice %4 {offsets = [0, 1], sizes = [8, 1], strides = [1, 1]} : vector<8x5xf32> to vector<8x1xf32>
    %cst_8 = arith.constant 0.000000e+00 : f32
    %80 = vector.shape_cast %79 : vector<8x1xf32> to vector<8x1xf32>
    %81 = vector.broadcast %80 : vector<8x1xf32> to vector<8x120xf32>
    %82 = vector.broadcast %cst_8 : f32 to vector<8x120xf32>
    %83 = arith.select %78, %81, %82 : vector<8x120xi1>, vector<8x120xf32>
    %84 = arith.addf %75, %83 : vector<8x120xf32>
    %85 = vector.extract_strided_slice %3 {offsets = [0, 12], sizes = [8, 1], strides = [1, 1]} : vector<8x15xi32> to vector<8x1xi32>
    %86 = vector.broadcast %85 : vector<8x1xi32> to vector<8x120xi32>
    %87 = arith.cmpi eq, %5, %86 : vector<8x120xi32>
    %88 = vector.extract_strided_slice %4 {offsets = [0, 2], sizes = [8, 1], strides = [1, 1]} : vector<8x5xf32> to vector<8x1xf32>
    %cst_9 = arith.constant 0.000000e+00 : f32
    %89 = vector.shape_cast %88 : vector<8x1xf32> to vector<8x1xf32>
    %90 = vector.broadcast %89 : vector<8x1xf32> to vector<8x120xf32>
    %91 = vector.broadcast %cst_9 : f32 to vector<8x120xf32>
    %92 = arith.select %87, %90, %91 : vector<8x120xi1>, vector<8x120xf32>
    %93 = arith.addf %84, %92 : vector<8x120xf32>
    %94 = vector.extract_strided_slice %3 {offsets = [0, 13], sizes = [8, 1], strides = [1, 1]} : vector<8x15xi32> to vector<8x1xi32>
    %95 = vector.broadcast %94 : vector<8x1xi32> to vector<8x120xi32>
    %96 = arith.cmpi eq, %5, %95 : vector<8x120xi32>
    %97 = vector.extract_strided_slice %4 {offsets = [0, 3], sizes = [8, 1], strides = [1, 1]} : vector<8x5xf32> to vector<8x1xf32>
    %cst_10 = arith.constant 0.000000e+00 : f32
    %98 = vector.shape_cast %97 : vector<8x1xf32> to vector<8x1xf32>
    %99 = vector.broadcast %98 : vector<8x1xf32> to vector<8x120xf32>
    %100 = vector.broadcast %cst_10 : f32 to vector<8x120xf32>
    %101 = arith.select %96, %99, %100 : vector<8x120xi1>, vector<8x120xf32>
    %102 = arith.addf %93, %101 : vector<8x120xf32>
    %103 = vector.extract_strided_slice %3 {offsets = [0, 14], sizes = [8, 1], strides = [1, 1]} : vector<8x15xi32> to vector<8x1xi32>
    %104 = vector.broadcast %103 : vector<8x1xi32> to vector<8x120xi32>
    %105 = arith.cmpi eq, %5, %104 : vector<8x120xi32>
    %106 = vector.extract_strided_slice %4 {offsets = [0, 4], sizes = [8, 1], strides = [1, 1]} : vector<8x5xf32> to vector<8x1xf32>
    %cst_11 = arith.constant 0.000000e+00 : f32
    %107 = vector.shape_cast %106 : vector<8x1xf32> to vector<8x1xf32>
    %108 = vector.broadcast %107 : vector<8x1xf32> to vector<8x120xf32>
    %109 = vector.broadcast %cst_11 : f32 to vector<8x120xf32>
    %110 = arith.select %105, %108, %109 : vector<8x120xi1>, vector<8x120xf32>
    %111 = arith.addf %102, %110 : vector<8x120xf32>
    %c0_12 = arith.constant 0 : index
    %c0_13 = arith.constant 0 : index
    %112 = vector.load %arg0[%c0_12, %c0_13] : memref<8x16xf32, #tpu.memory_space<vmem>>, vector<8x16xf32>
    %cst_14 = arith.constant dense<0.000000e+00> : vector<8x128xf32>
    %113 = tpu.matmul %112, %0, %cst_14 {dimension_numbers = #tpu.dot_dimension_numbers<[1], [0], [0], [1], [0, 0, 1, 1], [], []>} : vector<8x16xf32>, vector<16x128xf32>, vector<8x128xf32> -> vector<8x128xf32>
    %cst_15 = arith.constant dense<0.000000e+00> : vector<8x128xf32>
    %114 = tpu.matmul %111, %1, %cst_15 {dimension_numbers = #tpu.dot_dimension_numbers<[1], [0], [0], [1], [0, 0, 1, 1], [], []>} : vector<8x120xf32>, vector<120x128xf32>, vector<8x128xf32> -> vector<8x128xf32>
    %115 = arith.addf %113, %114 : vector<8x128xf32>
    %116 = vector.broadcast %2 : vector<1x128xf32> to vector<8x128xf32>
    %117 = arith.addf %115, %116 : vector<8x128xf32>
    %118 = arith.negf %117 : vector<8x128xf32>
    %119 = math.exp %118 : vector<8x128xf32>
    %cst_16 = arith.constant 1.000000e+00 : f32
    %120 = vector.broadcast %cst_16 : f32 to vector<8x128xf32>
    %121 = arith.addf %120, %119 : vector<8x128xf32>
    %122 = arith.divf %120, %121 : vector<8x128xf32>
    %c0_17 = arith.constant 0 : index
    %c0_18 = arith.constant 0 : index
    %123 = vector.load %arg4[%c0_17, %c0_18] : memref<8x128xf32, #tpu.memory_space<vmem>>, vector<8x128xf32>
    tpu.vector_store %arg4[%c0_17, %c0_18], %122 {strides = array<i32>} : memref<8x128xf32, #tpu.memory_space<vmem>>, vector<8x128xf32>,
    return
  }
}

</mosaic_0001>

<llo_original>
// kernel: fused_forward.1
$region0: #{fused_forward.1}
  #allocation0 [shape = 'u32[]', space=smem, size = 0x4, offset = 0x4, fixed_abs, tag = 'smem constant byte address 0x4 - core index']
  #allocation1 [shape = 'u32[144,128]{1,0:T(1,128)}', space=vmem, size = 0x12000, scoped, tag = 'internal scratch']
  %s0 = inlined_call_operand.vmem [shape: f32[8,16], index: 0, kind: input, shape index: {}]
  %s1 = inlined_call_operand.vmem [shape: s32[8,15], index: 1, kind: input, shape index: {}]
  %s2 = inlined_call_operand.vmem [shape: f32[8,5], index: 2, kind: input, shape index: {}]
  %s3 = inlined_call_operand.hbm [shape: f32[137,128], index: 3, kind: input, shape index: {}]
  %s4 = inlined_call_operand.vmem [shape: f32[8,128], index: 4, kind: output, shape index: {}]
  %s5 = sld [smem:[#allocation0]]
  $region30: #{fused_forward.1} parent=0
    _
  %s7 = ssub.s32 1, %s5
  %s8 = scalar_select 0, %s7, %s5
  $region1: #{fused_forward.1} parent=0
    #allocation2 [shape = 'u8[73728]{0}', space=vmem, size = 0x12000, scoped, tag = 'input window, operand 3, single buffered']
    #allocation3 [shape = 's32[1]{0}', space=sflag, size = 0x4, scoped, tag = 'scoped memory for fused_forward.1']
    %9 = vsyncpa [#allocation3], 0
    // Predicated region
    $region2: #{fused_forward.1} parent=1 // pred_check
      _
    $region3: #{fused_forward.1} parent=1 // pred_check_branch
      %11 = sbr.rel (0) target = $region5
    $region4: #{fused_forward.1} parent=1 // pred_region
      _
    $region5: #{fused_forward.1} parent=1 // pred_fallthru
      _
    // Predicated region
    $region6: #{fused_forward.1} parent=1 // pred_check
      _
    $region7: #{fused_forward.1} parent=1 // pred_check_branch
      %13 = sbr.rel (0) target = $region9
    $region8: #{fused_forward.1} parent=1 // pred_region
      _
    $region9: #{fused_forward.1} parent=1 // pred_fallthru
      _
    // Predicated region
    $region10: #{fused_forward.1} parent=1 // pred_check
      _
    $region11: #{fused_forward.1} parent=1 // pred_check_branch
      %15 = sbr.rel (0) target = $region13
    $region12: #{fused_forward.1} parent=1 // pred_region
      _
    $region13: #{fused_forward.1} parent=1 // pred_fallthru
      _
    // Predicated region
    $region14: #{fused_forward.1} parent=1 // pred_check
      _
    $region15: #{fused_forward.1} parent=1 // pred_check_branch
      %17 = sbr.rel (0) target = $region17
    $region16: #{fused_forward.1} parent=1 // pred_region
      %s19 = ssub.s32 2304, 2304
      %20 = vsyncadd [#allocation3], %s19
      %s21 = sshll.u32 [#allocation2], 4
      %s22 = int_to_ptr.vmem [resolvable:$true] %s21
      %27 = dma.hbm_to_vmem [thread:$0]  %s3, 2304, %s22, [#allocation3], 128, 128, 8
    $region17: #{fused_forward.1} parent=1 // pred_fallthru
      _
    // Predicated region
    $region18: #{fused_forward.1} parent=1 // pred_check
      _
    $region19: #{fused_forward.1} parent=1 // pred_check_branch
      %29 = sbr.rel (0) target = $region21
    $region20: #{fused_forward.1} parent=1 // pred_region
      %30 = dma.done [#allocation3], 2304
    $region21: #{fused_forward.1} parent=1 // pred_fallthru
      _
    %v31 = vld [vmem:[#allocation2] sm:$0xff]
    %v32 = vld [vmem:[#allocation2 + $0x8] sm:$0xff]
    %v33 = vld [vmem:[#allocation2 + $0x10] sm:$0xff]
    %v34 = vld [vmem:[#allocation2 + $0x18] sm:$0xff]
    %v35 = vld [vmem:[#allocation2 + $0x20] sm:$0xff]
    %v36 = vld [vmem:[#allocation2 + $0x28] sm:$0xff]
    %v37 = vld [vmem:[#allocation2 + $0x30] sm:$0xff]
    %v38 = vld [vmem:[#allocation2 + $0x38] sm:$0xff]
    %v39 = vld [vmem:[#allocation2 + $0x40] sm:$0xff]
    %v40 = vld [vmem:[#allocation2 + $0x48] sm:$0xff]
    %v41 = vld [vmem:[#allocation2 + $0x50] sm:$0xff]
    %v42 = vld [vmem:[#allocation2 + $0x58] sm:$0xff]
    %v43 = vld [vmem:[#allocation2 + $0x60] sm:$0xff]
    %v44 = vld [vmem:[#allocation2 + $0x68] sm:$0xff]
    %v45 = vld [vmem:[#allocation2 + $0x70] sm:$0xff]
    %v46 = vld [vmem:[#allocation2 + $0x78] sm:$0xff]
    %v47 = vld [vmem:[#allocation2 + $0x80] sm:$0xff]
    %v48 = vld [vmem:[#allocation2 + $0x88] sm:$0x1]
    %v49 = vld [vmem:[%s1] sm:$0xff]
    %v50 = vld [vmem:[%s2] sm:$0xff]
    %v51 = vlaneseq
    %v52 = vand.u32 %v51, 127
    %53 = vset.pattern.permute.xlu0 0
    %54 = vperm.xlu0 %53, %v49
    %v55 = vpop.permute.xlu0 %54
    %vm56 = vcmp.eq.s32.totalorder %v52, %v55
    %v57 = vsel %vm56, 1, 0
    %v58 = vcvt.s32.f32 %v57
    %v59 = vadd.f32 %v58, 0.0
    %60 = vset.pattern.permute.xlu0 1
    %61 = vperm.xlu0 %60, %v49
    %v62 = vpop.permute.xlu0 %61
    %vm63 = vcmp.eq.s32.totalorder %v52, %v62
    %v64 = vsel %vm63, 1, 0
    %v65 = vcvt.s32.f32 %v64
    %v66 = vadd.f32 %v59, %v65
    %67 = vset.pattern.permute.xlu0 2
    %68 = vperm.xlu0 %67, %v49
    %v69 = vpop.permute.xlu0 %68
    %vm70 = vcmp.eq.s32.totalorder %v52, %v69
    %v71 = vsel %vm70, 1, 0
    %v72 = vcvt.s32.f32 %v71
    %v73 = vadd.f32 %v66, %v72
    %74 = vset.pattern.permute.xlu0 3
    %75 = vperm.xlu0 %74, %v49
    %v76 = vpop.permute.xlu0 %75
    %vm77 = vcmp.eq.s32.totalorder %v52, %v76
    %v78 = vsel %vm77, 1, 0
    %v79 = vcvt.s32.f32 %v78
    %v80 = vadd.f32 %v73, %v79
    %81 = vset.pattern.permute.xlu0 4
    %82 = vperm.xlu0 %81, %v49
    %v83 = vpop.permute.xlu0 %82
    %vm84 = vcmp.eq.s32.totalorder %v52, %v83
    %v85 = vsel %vm84, 1, 0
    %v86 = vcvt.s32.f32 %v85
    %v87 = vadd.f32 %v80, %v86
    %88 = vset.pattern.permute.xlu0 5
    %89 = vperm.xlu0 %88, %v49
    %v90 = vpop.permute.xlu0 %89
    %vm91 = vcmp.eq.s32.totalorder %v52, %v90
    %v92 = vsel %vm91, 1, 0
    %v93 = vcvt.s32.f32 %v92
    %v94 = vadd.f32 %v87, %v93
    %95 = vset.pattern.permute.xlu0 6
    %96 = vperm.xlu0 %95, %v49
    %v97 = vpop.permute.xlu0 %96
    %vm98 = vcmp.eq.s32.totalorder %v52, %v97
    %v99 = vsel %vm98, 1, 0
    %v100 = vcvt.s32.f32 %v99
    %v101 = vadd.f32 %v94, %v100
    %102 = vset.pattern.permute.xlu0 7
    %103 = vperm.xlu0 %102, %v49
    %v104 = vpop.permute.xlu0 %103
    %vm105 = vcmp.eq.s32.totalorder %v52, %v104
    %v106 = vsel %vm105, 1, 0
    %v107 = vcvt.s32.f32 %v106
    %v108 = vadd.f32 %v101, %v107
    %109 = vset.pattern.permute.xlu0 8
    %110 = vperm.xlu0 %109, %v49
    %v111 = vpop.permute.xlu0 %110
    %vm112 = vcmp.eq.s32.totalorder %v52, %v111
    %v113 = vsel %vm112, 1, 0
    %v114 = vcvt.s32.f32 %v113
    %v115 = vadd.f32 %v108, %v114
    %116 = vset.pattern.permute.xlu0 9
    %117 = vperm.xlu0 %116, %v49
    %v118 = vpop.permute.xlu0 %117
    %vm119 = vcmp.eq.s32.totalorder %v52, %v118
    %v120 = vsel %vm119, 1, 0
    %v121 = vcvt.s32.f32 %v120
    %v122 = vadd.f32 %v115, %v121
    %123 = vset.pattern.permute.xlu0 10
    %124 = vperm.xlu0 %123, %v49
    %v125 = vpop.permute.xlu0 %124
    %vm126 = vcmp.eq.s32.totalorder %v52, %v125
    %128 = vset.pattern.permute.xlu0 0
    %129 = vperm.xlu0 %128, %v50
    %v130 = vpop.permute.xlu0 %129
    %v132 = vsel %vm126, %v130, 0.0
    %v133 = vadd.f32 %v122, %v132
    %134 = vset.pattern.permute.xlu0 11
    %135 = vperm.xlu0 %134, %v49
    %v136 = vpop.permute.xlu0 %135
    %vm137 = vcmp.eq.s32.totalorder %v52, %v136
    %138 = vset.pattern.permute.xlu0 1
    %139 = vperm.xlu0 %138, %v50
    %v140 = vpop.permute.xlu0 %139
    %v142 = vsel %vm137, %v140, 0.0
    %v143 = vadd.f32 %v133, %v142
    %144 = vset.pattern.permute.xlu0 12
    %145 = vperm.xlu0 %144, %v49
    %v146 = vpop.permute.xlu0 %145
    %vm147 = vcmp.eq.s32.totalorder %v52, %v146
    %148 = vset.pattern.permute.xlu0 2
    %149 = vperm.xlu0 %148, %v50
    %v150 = vpop.permute.xlu0 %149
    %v152 = vsel %vm147, %v150, 0.0
    %v153 = vadd.f32 %v143, %v152
    %154 = vset.pattern.permute.xlu0 13
    %155 = vperm.xlu0 %154, %v49
    %v156 = vpop.permute.xlu0 %155
    %vm157 = vcmp.eq.s32.totalorder %v52, %v156
    %158 = vset.pattern.permute.xlu0 3
    %159 = vperm.xlu0 %158, %v50
    %v160 = vpop.permute.xlu0 %159
    %v162 = vsel %vm157, %v160, 0.0
    %v163 = vadd.f32 %v153, %v162
    %164 = vset.pattern.permute.xlu0 14
    %165 = vperm.xlu0 %164, %v49
    %v166 = vpop.permute.xlu0 %165
    %vm167 = vcmp.eq.s32.totalorder %v52, %v166
    %168 = vset.pattern.permute.xlu0 4
    %169 = vperm.xlu0 %168, %v50
    %v170 = vpop.permute.xlu0 %169
    %v172 = vsel %vm167, %v170, 0.0
    %v173 = vadd.f32 %v163, %v172
    %v174 = vld [vmem:[%s0] sm:$0xff]
    %vm175 = vcmask 982016
    %v177 = vsel %vm175, %v173, 0
    %179 = vmatprep.subr.mxu0 0.0
    %180 = vmatpush1.msra.mxu0 %v33
    %181 = vmatprep.subr.mxu0 0.0
    %182 = vmatpush1.msra.mxu0 %v34
    %183 = vmatprep.subr.mxu0 0.0
    %184 = vmatpush1.msra.mxu0 %v35
    %185 = vmatprep.subr.mxu0 0.0
    %186 = vmatpush1.msra.mxu0 %v36
    %187 = vmatprep.subr.mxu0 0.0
    %188 = vmatpush1.msra.mxu0 %v37
    %189 = vmatprep.subr.mxu0 0.0
    %190 = vmatpush1.msra.mxu0 %v38
    %191 = vmatprep.subr.mxu0 0.0
    %192 = vmatpush1.msra.mxu0 %v39
    %193 = vmatprep.subr.mxu0 0.0
    %194 = vmatpush1.msra.mxu0 %v40
    %195 = vmatprep.subr.mxu0 0.0
    %196 = vmatpush1.msra.mxu0 %v41
    %197 = vmatprep.subr.mxu0 0.0
    %198 = vmatpush1.msra.mxu0 %v42
    %199 = vmatprep.subr.mxu0 0.0
    %200 = vmatpush1.msra.mxu0 %v43
    %201 = vmatprep.subr.mxu0 0.0
    %202 = vmatpush1.msra.mxu0 %v44
    %203 = vmatprep.subr.mxu0 0.0
    %204 = vmatpush1.msra.mxu0 %v45
    %205 = vmatprep.subr.mxu0 0.0
    %206 = vmatpush1.msra.mxu0 %v46
    %207 = vmatprep.subr.mxu0 0.0
    %208 = vmatpush1.msra.mxu0 %v47
    %209 = vmatprep.subr.mxu0 0.0
    %210 = vmatpush1.msra.mxu0 0.0
    %211 = vmatprep.subr.mxu0 0.0
    %212 = vmatpush1.msra.mxu0 0.0
    %213 = vmatprep.subr.mxu0 0.0
    %214 = vmatpush1.msra.mxu0 0.0
    %215 = vmatprep.subr.mxu0 0.0
    %216 = vmatpush1.msra.mxu0 0.0
    %217 = vmatprep.subr.mxu0 0.0
    %218 = vmatpush1.msra.mxu0 0.0
    %219 = vmatprep.subr.mxu0 0.0
    %220 = vmatpush1.msra.mxu0 0.0
    %221 = vmatprep.subr.mxu0 0.0
    %222 = vmatpush1.msra.mxu0 0.0
    %223 = vmatprep.subr.mxu0 0.0
    %224 = vmatpush1.msra.mxu0 0.0
    %225 = vmatprep.subr.mxu0 0.0
    %226 = vmatpush1.msra.mxu0 0.0
    %227 = vmatprep.subr.mxu0 0.0
    %228 = vmatpush1.msra.mxu0 0.0
    %229 = vmatprep.subr.mxu0 0.0
    %230 = vmatpush1.msra.mxu0 0.0
    %231 = vmatprep.subr.mxu0 0.0
    %232 = vmatpush1.msra.mxu0 0.0
    %233 = vmatprep.subr.mxu0 0.0
    %234 = vmatpush1.msra.mxu0 0.0
    %235 = vmatprep.subr.mxu0 0.0
    %236 = vmatpush1.msra.mxu0 0.0
    %237 = vmatprep.subr.mxu0 0.0
    %238 = vmatpush1.msra.mxu0 0.0
    %239 = vmatprep.subr.mxu0 0.0
    %240 = vmatpush1.msra.mxu0 0.0
    %241 = vmatprep.subr.mxu0 0.0
    %242 = vmatpush1.msra.mxu0 0.0
    %243 = vmatprep.mubr.f32.mxu0 0.0
    %244 = vmatmul.mubr.f32.gmra.mrb[0].mxu0 %v177
    %v245 = vpop.f32.mrb[0].mxu0
    %v246 = vadd.f32 0.0, %v245
    %v247 = vpop.f32.mrb[0].mxu0
    %248 = vdwg.mxu0
    %vm249 = vcmask 130048
    %v251 = vsel %vm249, %v174, 0
    %253 = vmatprep.subr.mxu0 0.0
    %254 = vmatpush1.msra.mxu0 %v31
    %255 = vmatprep.subr.mxu0 0.0
    %256 = vmatpush1.msra.mxu0 %v32
    %257 = vmatprep.subr.mxu0 0.0
    %258 = vmatpush1.msra.mxu0 0.0
    %259 = vmatprep.subr.mxu0 0.0
    %260 = vmatpush1.msra.mxu0 0.0
    %261 = vmatprep.subr.mxu0 0.0
    %262 = vmatpush1.msra.mxu0 0.0
    %263 = vmatprep.subr.mxu0 0.0
    %264 = vmatpush1.msra.mxu0 0.0
    %265 = vmatprep.subr.mxu0 0.0
    %266 = vmatpush1.msra.mxu0 0.0
    %267 = vmatprep.subr.mxu0 0.0
    %268 = vmatpush1.msra.mxu0 0.0
    %269 = vmatprep.subr.mxu0 0.0
    %270 = vmatpush1.msra.mxu0 0.0
    %271 = vmatprep.subr.mxu0 0.0
    %272 = vmatpush1.msra.mxu0 0.0
    %273 = vmatprep.subr.mxu0 0.0
    %274 = vmatpush1.msra.mxu0 0.0
    %275 = vmatprep.subr.mxu0 0.0
    %276 = vmatpush1.msra.mxu0 0.0
    %277 = vmatprep.subr.mxu0 0.0
    %278 = vmatpush1.msra.mxu0 0.0
    %279 = vmatprep.subr.mxu0 0.0
    %280 = vmatpush1.msra.mxu0 0.0
    %281 = vmatprep.subr.mxu0 0.0
    %282 = vmatpush1.msra.mxu0 0.0
    %283 = vmatprep.subr.mxu0 0.0
    %284 = vmatpush1.msra.mxu0 0.0
    %285 = vmatprep.subr.mxu0 0.0
    %286 = vmatpush1.msra.mxu0 0.0
    %287 = vmatprep.subr.mxu0 0.0
    %288 = vmatpush1.msra.mxu0 0.0
    %289 = vmatprep.subr.mxu0 0.0
    %290 = vmatpush1.msra.mxu0 0.0
    %291 = vmatprep.subr.mxu0 0.0
    %292 = vmatpush1.msra.mxu0 0.0
    %293 = vmatprep.subr.mxu0 0.0
    %294 = vmatpush1.msra.mxu0 0.0
    %295 = vmatprep.subr.mxu0 0.0
    %296 = vmatpush1.msra.mxu0 0.0
    %297 = vmatprep.subr.mxu0 0.0
    %298 = vmatpush1.msra.mxu0 0.0
    %299 = vmatprep.subr.mxu0 0.0
    %300 = vmatpush1.msra.mxu0 0.0
    %301 = vmatprep.subr.mxu0 0.0
    %302 = vmatpush1.msra.mxu0 0.0
    %303 = vmatprep.subr.mxu0 0.0
    %304 = vmatpush1.msra.mxu0 0.0
    %305 = vmatprep.subr.mxu0 0.0
    %306 = vmatpush1.msra.mxu0 0.0
    %307 = vmatprep.subr.mxu0 0.0
    %308 = vmatpush1.msra.mxu0 0.0
    %309 = vmatprep.subr.mxu0 0.0
    %310 = vmatpush1.msra.mxu0 0.0
    %311 = vmatprep.subr.mxu0 0.0
    %312 = vmatpush1.msra.mxu0 0.0
    %313 = vmatprep.subr.mxu0 0.0
    %314 = vmatpush1.msra.mxu0 0.0
    %315 = vmatprep.subr.mxu0 0.0
    %316 = vmatpush1.msra.mxu0 0.0
    %317 = vmatprep.mubr.f32.mxu0 0.0
    %318 = vmatmul.mubr.f32.gmra.mrb[0].mxu0 %v251
    %v319 = vpop.f32.mrb[0].mxu0
    %v320 = vadd.f32 %v246, %v319
    %v321 = vpop.f32.mrb[0].mxu0
    %322 = vdwg.mxu0
    %v323 = vlaneseq
    %v324 = vshrl.u32 %v323, 7
    %v325 = vsub.s32 0, %v324
    %v326 = vrot.slane %v48, %v325
    %v327 = vadd.f32 %v320, %v326
    %v328 = vxor.u32 %v327, 2147483648
    %v329 = vmul.f32 %v328, 1.442695
    %v330 = vpow.pop %v329
    %v331 = vadd.f32 %v330, 1.0
    %v332 = vrcp.pop %v331
    %v333 = vmul.f32 1.0, %v332
    %334 = vst [vmem:[%s4] sm:$0xff] %v333
    // Predicated region
    $region22: #{fused_forward.1} parent=1 // pred_check
      _
    $region23: #{fused_forward.1} parent=1 // pred_check_branch
      %336 = sbr.rel (0) target = $region25
    $region24: #{fused_forward.1} parent=1 // pred_region
      _
    $region25: #{fused_forward.1} parent=1 // pred_fallthru
      _
    // Predicated region
    $region26: #{fused_forward.1} parent=1 // pred_check
      _
    $region27: #{fused_forward.1} parent=1 // pred_check_branch
      %338 = sbr.rel (0) target = $region29
    $region28: #{fused_forward.1} parent=1 // pred_region
      _
    $region29: #{fused_forward.1} parent=1 // pred_fallthru
      _
    %339 = vsyncpa [#allocation3], 1

</llo_original>
